<compile_context>
chip_gen: v6e
topology: v6e:2x2x1
jax: 0.10.0
libtpu: 0.0.40
codegen_flags: <defaults>
</compile_context>

<pallas_src>
import math
from functools import partial

import jax
import jax.numpy as jnp
from jax.experimental import pallas as pl
from jax.experimental.pallas import tpu as pltpu


def _round_up(x, m):
    return ((x + m - 1) // m) * m


def _cheb_kernel(x_ref, g_ref, w_ref, *rest, Ks, use_bias):
    """One lane-dense column tile of S slabs.

    x_ref: (N*C_in, S)            input tile; column s = flattened (b, t) slab
    g_ref: (N*C_in, N*C_in)       kron(gso, I_{C_in}); grid-constant
    w_ref: (Ks, N*C_out, N*C_in)  node-block-diag expanded weight; grid-constant
    b_ref: (N*C_out, 1)           expanded bias column (only if use_bias)
    o_ref: (N*C_out, S)           lane-dense output tile (unmasked full stores)
    """
    if use_bias:
        b_ref, o_ref = rest
    else:
        (o_ref,) = rest

    x0 = x_ref[...]                        # (NC_in, S), native input dtype
    dt = x0.dtype

    # k = 0 contribution; every weight contraction accumulates straight into
    # the f32 accumulator (no Ks-wide concat buffer).
    acc = jnp.dot(w_ref[0], x0, preferred_element_type=jnp.float32)

    if Ks >= 2:
        g = g_ref[...]
        # Chebyshev recursion on the whole tile.  Carries stay in f32
        # (bf16-safe); MXU operands stay in the input dtype.
        x1 = jnp.dot(g, x0, preferred_element_type=jnp.float32)
        acc += jnp.dot(w_ref[1], x1.astype(dt),
                       preferred_element_type=jnp.float32)
        x_km2, x_km1 = x0.astype(jnp.float32), x1
        for k in range(2, Ks):
            # 2*(G @ X_{k-1}) - X_{k-2}: the scalar *2 on the f32 accumulator
            # replaces a whole resident 2*G operand (extra VMEM + HBM fetch).
            xk = 2.0 * jnp.dot(g, x_km1.astype(dt),
                               preferred_element_type=jnp.float32) - x_km2
            acc += jnp.dot(w_ref[k], xk.astype(dt),
                           preferred_element_type=jnp.float32)
            x_km2, x_km1 = x_km1, xk

    if use_bias:
        acc = acc + b_ref[...].astype(jnp.float32)   # broadcast over lanes

    o_ref[...] = acc.astype(o_ref.dtype)


def cheb_graph_conv_2d(x2d, gso, weight, bias=None, *, col_tile=512,
                       target_steps=4):
    """Chebyshev graph conv on the 2-D slab layout.

    x2d: (N*C_in, BT) with row = n*C_in + c and column = b*T + t.
    Returns (N*C_out, BT).  Stacked Cheb layers should call this directly and
    keep the 2-D layout between layers; the 4-D wrapper's transposes are
    separate HBM-bound XLA ops.
    """
    Ks, C_in, C_out = weight.shape
    if Ks - 1 < 0:
        raise ValueError(
            f"ERROR: the graph convolution kernel size Ks has to be a positive "
            f"integer, but received {Ks}.")
    NC_in, BT = x2d.shape
    N = NC_in // C_in
    assert N * C_in == NC_in
    NC_out = N * C_out

    # ---- lane tile / grid sizing ---------------------------------------------
    # Multiple of 128 (lane-dense stores), sized so the grid has >= target_steps
    # steps when BT allows it (pipeline overlap; megacore sharding on v7x).
    # col_tile: raise toward 1024-2048 on v5e/v6e for very large BT; keep
    # <= 1024 on v7x (64 MiB VMEM, keep grid >= 2 per core).
    col_tile = max(128, _round_up(col_tile, 128))
    S = _round_up(max(1, -(-BT // max(1, target_steps))), 128)
    S = min(S, col_tile, _round_up(BT, 128))
    padded_bt = _round_up(BT, S)
    x_pad = jnp.pad(x2d, ((0, 0), (0, padded_bt - BT))) if padded_bt != BT else x2d
    grid = (padded_bt // S,)

    # ---- parameter-only preprocessing ----------------------------------------
    # (Hoist / cache on the module when stacking layers so it is amortized
    # across forward calls rather than recomputed inside every jitted step.)
    #   G = kron(gso, I_{C_in}) applies gso to every slab of a tile in one GEMM.
    #   W_exp[k, (n,j), (m,i)] = delta(n,m) * weight[k,i,j].
    g_kron = jnp.kron(gso, jnp.eye(C_in, dtype=gso.dtype))         # (NC_in, NC_in)
    eye_n = jnp.eye(N, dtype=weight.dtype)
    w_exp = jnp.einsum('nm,kij->knjmi', eye_n, weight).reshape(Ks, NC_out, NC_in)

    use_bias = bias is not None

    # VMEM guardrail: resident G is O((N*C_in)^2) f32 and W_exp is
    # O(Ks*N^2*C_in*C_out); Buffered(1) keeps them single-buffered.  ~0.1 MiB
    # here; past N*C_in ~ 1-2K (v7x 64 MiB / 32 MiB scoped default first) use
    # bf16 operands and tile the G contraction over an inner 'arbitrary' axis.
    args = [x_pad, g_kron, w_exp]
    in_specs = [
        pl.BlockSpec((NC_in, S), lambda i: (0, i)),                 # x tile
        pl.BlockSpec((NC_in, NC_in), lambda i: (0, 0),
                     pipeline_mode=pl.Buffered(1)),                 # G (const)
        pl.BlockSpec((Ks, NC_out, NC_in), lambda i: (0, 0, 0),
                     pipeline_mode=pl.Buffered(1)),                 # W_exp (const)
    ]
    if use_bias:
        b_col = jnp.tile(bias.reshape(1, C_out), (N, 1)).reshape(NC_out, 1)
        args.append(b_col)
        in_specs.append(pl.BlockSpec((NC_out, 1), lambda i: (0, 0),
                                     pipeline_mode=pl.Buffered(1))) # bias (const)

    kernel = partial(_cheb_kernel, Ks=Ks, use_bias=use_bias)

    out2d = pl.pallas_call(
        kernel,
        out_shape=jax.ShapeDtypeStruct((NC_out, padded_bt), x2d.dtype),
        grid_spec=pltpu.PrefetchScalarGridSpec(
            num_scalar_prefetch=0,
            grid=grid,
            in_specs=in_specs,
            out_specs=pl.BlockSpec((NC_out, S), lambda i: (0, i)),
        ),
        compiler_params=pltpu.CompilerParams(
            dimension_semantics=("parallel",)),
    )(*args)

    return out2d[:, :BT] if padded_bt != BT else out2d


def cheb_graph_conv(x_nchw, gso, weight, bias=None, *, col_tile=512):
    """x_nchw: (B, C_in, T, N); gso: (N, N); weight: (Ks, C_in, C_out);
    bias: (C_out,) or None.  Returns (B, T, N, C_out) like the PyTorch module.

    TODO(synk): when Cheb layers are stacked, keep activations in the 2-D
    (N*C, B*T) layout between layers (call cheb_graph_conv_2d directly); the
    two transposes below are HBM round-trips outside the kernel.
    """
    B, C_in, T, N = x_nchw.shape
    Ks, c_in_w, C_out = weight.shape
    assert c_in_w == C_in
    # (B, C_in, T, N) -> (N*C_in, B*T): column s = b*T + t holds slab x[b,:,t,:]
    x2d = jnp.transpose(x_nchw, (3, 1, 0, 2)).reshape(N * C_in, B * T)
    out2d = cheb_graph_conv_2d(x2d, gso, weight, bias, col_tile=col_tile)
    return out2d.reshape(N, C_out, B, T).transpose(2, 3, 0, 1)


def _reference(x_nchw, gso, weight, bias):
    """Pure-JAX reference reproducing the PyTorch forward."""
    x = jnp.transpose(x_nchw, (0, 2, 3, 1))
    Ks = weight.shape[0]
    x_list = [x]
    if Ks >= 2:
        x_list.append(jnp.einsum('hi,btij->bthj', gso, x))
        for k in range(2, Ks):
            x_list.append(
                jnp.einsum('hi,btij->bthj', 2.0 * gso, x_list[k - 1]) - x_list[k - 2])
    xs = jnp.stack(x_list, axis=2)                        # (B, T, Ks, N, C_in)
    out = jnp.einsum('btkhi,kij->bthj', xs, weight)       # (B, T, N, C_out)
    if bias is not None:
        out = out + bias
    return out


def _run_case(key, B, C_in, T, N, C_out, Ks, use_bias, col_tile=512):
    k_x, k_w, k_b, k_g = jax.random.split(key, 4)
    x = jax.random.normal(k_x, (B, C_in, T, N), dtype=jnp.float32)

    # kaiming_uniform_(a=sqrt(5)) on (Ks, c_in, c_out): fan_in = c_in * c_out,
    # bound = 1/sqrt(fan_in); same bound for the bias.
    fan_in = C_in * C_out
    bound = 1.0 / math.sqrt(fan_in)
    weight = jax.random.uniform(k_w, (Ks, C_in, C_out), jnp.float32, -bound, bound)
    bias = (jax.random.uniform(k_b, (C_out,), jnp.float32, -bound, bound)
            if use_bias else None)

    # Deterministic symmetric, spectrally scaled graph shift operator.
    A = jax.random.uniform(k_g, (N, N), jnp.float32)
    A = 0.5 * (A + A.T)
    gso = A / jnp.linalg.norm(A, ord=2)

    out = cheb_graph_conv(x, gso, weight, bias, col_tile=col_tile)
    out = jax.block_until_ready(out)

    ref = _reference(x, gso, weight, bias)
    assert out.shape == (B, T, N, C_out)
    assert bool(jnp.allclose(out, ref, atol=1e-4, rtol=1e-4)), (
        f"max abs err {float(jnp.max(jnp.abs(out - ref)))}")


if __name__ == "__main__":
    key = jax.random.PRNGKey(0)
    k1, k2, k3 = jax.random.split(key, 3)

    # Primary small config (module-consistent): batch=2, c_in=4, T=16, N=16.
    _run_case(k1, B=2, C_in=4, T=16, N=16, C_out=8, Ks=3, use_bias=True)

    # Multi-step grid (BT=160 -> S=128, grid=2), column-padding remainder,
    # Ks=2, bias-free path.
    _run_case(k2, B=2, C_in=4, T=80, N=16, C_out=8, Ks=2, use_bias=False)

    # Ks=1 path (no recursion, bias only).
    _run_case(k3, B=1, C_in=4, T=16, N=16, C_out=8, Ks=1, use_bias=True)

    print("KERNEL_OK")
</pallas_src>

<mosaic_0001>
module attributes {stable_mosaic.version = 11 : i64} {
  func.func @_cheb_kernel(%arg0: i32, %arg1: memref<64x128xf32, #tpu.memory_space<vmem>>, %arg2: memref<64x64xf32, #tpu.memory_space<vmem>>, %arg3: memref<3x128x64xf32, #tpu.memory_space<vmem>>, %arg4: memref<128x1xf32, #tpu.memory_space<vmem>>, %arg5: memref<128x128xf32, #tpu.memory_space<vmem>>) attributes {dimension_semantics = [#tpu.dimension_semantics<parallel>], iteration_bounds = array<i64: 1>, scalar_prefetch = 0 : i64, scratch_operands = 0 : i64, tpu.core_type = #tpu.core_type<tc>, window_params = [{transform_indices = @transform_0, window_bounds = array<i64: 64, 128>}, {pipeline_mode = #tpu.pipeline_mode<synchronous>, transform_indices = @transform_1, window_bounds = array<i64: 64, 64>}, {pipeline_mode = #tpu.pipeline_mode<synchronous>, transform_indices = @transform_2, window_bounds = array<i64: 3, 128, 64>}, {pipeline_mode = #tpu.pipeline_mode<synchronous>, transform_indices = @transform_3, window_bounds = array<i64: 128, 1>}, {transform_indices = @transform_4, window_bounds = array<i64: 128, 128>}]} {
    %c0 = arith.constant 0 : index
    %c0_0 = arith.constant 0 : index
    %0 = vector.load %arg1[%c0, %c0_0] : memref<64x128xf32, #tpu.memory_space<vmem>>, vector<64x128xf32>
    %c0_1 = arith.constant 0 : index
    %c0_2 = arith.constant 0 : index
    %c0_3 = arith.constant 0 : index
    %1 = vector.load %arg3[%c0_1, %c0_2, %c0_3] : memref<3x128x64xf32, #tpu.memory_space<vmem>>, vector<1x128x64xf32>
    %2 = vector.shape_cast %1 : vector<1x128x64xf32> to vector<128x64xf32>
    %cst = arith.constant dense<0.000000e+00> : vector<128x128xf32>
    %3 = tpu.matmul %2, %0, %cst {dimension_numbers = #tpu.dot_dimension_numbers<[1], [0], [0], [1], [0, 0, 1, 1], [], []>} : vector<128x64xf32>, vector<64x128xf32>, vector<128x128xf32> -> vector<128x128xf32>
    %c0_4 = arith.constant 0 : index
    %c0_5 = arith.constant 0 : index
    %4 = vector.load %arg2[%c0_4, %c0_5] : memref<64x64xf32, #tpu.memory_space<vmem>>, vector<64x64xf32>
    %cst_6 = arith.constant dense<0.000000e+00> : vector<64x128xf32>
    %5 = tpu.matmul %4, %0, %cst_6 {dimension_numbers = #tpu.dot_dimension_numbers<[1], [0], [0], [1], [0, 0, 1, 1], [], []>} : vector<64x64xf32>, vector<64x128xf32>, vector<64x128xf32> -> vector<64x128xf32>
    %c1 = arith.constant 1 : index
    %c0_7 = arith.constant 0 : index
    %c0_8 = arith.constant 0 : index
    %6 = vector.load %arg3[%c1, %c0_7, %c0_8] : memref<3x128x64xf32, #tpu.memory_space<vmem>>, vector<1x128x64xf32>
    %7 = vector.shape_cast %6 : vector<1x128x64xf32> to vector<128x64xf32>
    %cst_9 = arith.constant dense<0.000000e+00> : vector<128x128xf32>
    %8 = tpu.matmul %7, %5, %cst_9 {dimension_numbers = #tpu.dot_dimension_numbers<[1], [0], [0], [1], [0, 0, 1, 1], [], []>} : vector<128x64xf32>, vector<64x128xf32>, vector<128x128xf32> -> vector<128x128xf32>
    %9 = arith.addf %3, %8 : vector<128x128xf32>
    %cst_10 = arith.constant dense<0.000000e+00> : vector<64x128xf32>
    %10 = tpu.matmul %4, %5, %cst_10 {dimension_numbers = #tpu.dot_dimension_numbers<[1], [0], [0], [1], [0, 0, 1, 1], [], []>} : vector<64x64xf32>, vector<64x128xf32>, vector<64x128xf32> -> vector<64x128xf32>
    %cst_11 = arith.constant 2.000000e+00 : f32
    %11 = vector.broadcast %cst_11 : f32 to vector<64x128xf32>
    %12 = arith.mulf %11, %10 : vector<64x128xf32>
    %13 = arith.subf %12, %0 : vector<64x128xf32>
    %c2 = arith.constant 2 : index
    %c0_12 = arith.constant 0 : index
    %c0_13 = arith.constant 0 : index
    %14 = vector.load %arg3[%c2, %c0_12, %c0_13] : memref<3x128x64xf32, #tpu.memory_space<vmem>>, vector<1x128x64xf32>
    %15 = vector.shape_cast %14 : vector<1x128x64xf32> to vector<128x64xf32>
    %cst_14 = arith.constant dense<0.000000e+00> : vector<128x128xf32>
    %16 = tpu.matmul %15, %13, %cst_14 {dimension_numbers = #tpu.dot_dimension_numbers<[1], [0], [0], [1], [0, 0, 1, 1], [], []>} : vector<128x64xf32>, vector<64x128xf32>, vector<128x128xf32> -> vector<128x128xf32>
    %17 = arith.addf %9, %16 : vector<128x128xf32>
    %c0_15 = arith.constant 0 : index
    %c0_16 = arith.constant 0 : index
    %18 = vector.load %arg4[%c0_15, %c0_16] : memref<128x1xf32, #tpu.memory_space<vmem>>, vector<128x1xf32>
    %19 = vector.broadcast %18 : vector<128x1xf32> to vector<128x128xf32>
    %20 = arith.addf %17, %19 : vector<128x128xf32>
    %c0_17 = arith.constant 0 : index
    %c0_18 = arith.constant 0 : index
    %21 = vector.load %arg5[%c0_17, %c0_18] : memref<128x128xf32, #tpu.memory_space<vmem>>, vector<128x128xf32>
    tpu.vector_store %arg5[%c0_17, %c0_18], %20 {strides = array<i32>} : memref<128x128xf32, #tpu.memory_space<vmem>>, vector<128x128xf32>,
    return
  }
  func.func @transform_0(%arg0: i32) -> (i32, i32) {
    %c0_i32 = arith.constant 0 : i32
    %c0_i32_0 = arith.constant 0 : i32
    return %c0_i32, %arg0 : i32, i32
  }
  func.func @transform_1(%arg0: i32) -> (i32, i32) {
    %c0_i32 = arith.constant 0 : i32
    %c0_i32_0 = arith.constant 0 : i32
    %c0_i32_1 = arith.constant 0 : i32
    return %c0_i32, %c0_i32_0 : i32, i32
  }
  func.func @transform_2(%arg0: i32) -> (i32, i32, i32) {
    %c0_i32 = arith.constant 0 : i32
    %c0_i32_0 = arith.constant 0 : i32
    %c0_i32_1 = arith.constant 0 : i32
    %c0_i32_2 = arith.constant 0 : i32
    return %c0_i32, %c0_i32_0, %c0_i32_1 : i32, i32, i32
  }
  func.func @transform_3(%arg0: i32) -> (i32, i32) {
    %c0_i32 = arith.constant 0 : i32
    %c0_i32_0 = arith.constant 0 : i32
    %c0_i32_1 = arith.constant 0 : i32
    return %c0_i32, %c0_i32_0 : i32, i32
  }
  func.func @transform_4(%arg0: i32) -> (i32, i32) {
    %c0_i32 = arith.constant 0 : i32
    %c0_i32_0 = arith.constant 0 : i32
    return %c0_i32, %arg0 : i32, i32
  }
}

</mosaic_0001>

<llo_original>
// kernel: tpu_custom_call.1
$region0: #{tpu_custom_call.1}
  #allocation0 [shape = 'u32[]', space=smem, size = 0x4, offset = 0x4, fixed_abs, tag = 'smem constant byte address 0x4 - core index']
  #allocation1 [shape = 'u32[144,128]{1,0:T(1,128)}', space=vmem, size = 0x12000, scoped, tag = 'internal scratch']
  %s0 = inlined_call_operand.vmem [shape: f32[64,128], index: 0, kind: input, shape index: {}]
  %s1 = inlined_call_operand.vmem [shape: f32[64,64], index: 1, kind: input, shape index: {}]
  %s2 = inlined_call_operand.vmem [shape: f32[3,128,64], index: 2, kind: input, shape index: {}]
  %s3 = inlined_call_operand.vmem [shape: f32[128,1], index: 3, kind: input, shape index: {}]
  %s4 = inlined_call_operand.hbm [shape: f32[128,128], index: 4, kind: output, shape index: {}]
  %s5 = sld [smem:[#allocation0]]
  $region26: #{tpu_custom_call.1} parent=0
    _
  %s7 = ssub.s32 1, %s5
  %s8 = scalar_select 0, %s7, %s5
  $region1: #{tpu_custom_call.1} parent=0
    #allocation2 [shape = 'u8[65536]{0}', space=vmem, size = 0x10000, scoped, tag = 'output window, operand 0, single buffered']
    #allocation3 [shape = 's32[1]{0}', space=sflag, size = 0x4, scoped, tag = 'scoped memory for tpu_custom_call.1']
    %9 = vsyncpa [#allocation3], 0
    // Predicated region
    $region2: #{tpu_custom_call.1} parent=1 // pred_check
      _
    $region3: #{tpu_custom_call.1} parent=1 // pred_check_branch
      %11 = sbr.rel (0) target = $region5
    $region4: #{tpu_custom_call.1} parent=1 // pred_region
      _
    $region5: #{tpu_custom_call.1} parent=1 // pred_fallthru
      _
    // Predicated region
    $region6: #{tpu_custom_call.1} parent=1 // pred_check
      _
    $region7: #{tpu_custom_call.1} parent=1 // pred_check_branch
      %13 = sbr.rel (0) target = $region9
    $region8: #{tpu_custom_call.1} parent=1 // pred_region
      _
    $region9: #{tpu_custom_call.1} parent=1 // pred_fallthru
      _
    // Predicated region
    $region10: #{tpu_custom_call.1} parent=1 // pred_check
      _
    $region11: #{tpu_custom_call.1} parent=1 // pred_check_branch
      %15 = sbr.rel (0) target = $region13
    $region12: #{tpu_custom_call.1} parent=1 // pred_region
      _
    $region13: #{tpu_custom_call.1} parent=1 // pred_fallthru
      _
    // Predicated region
    $region14: #{tpu_custom_call.1} parent=1 // pred_check
      _
    $region15: #{tpu_custom_call.1} parent=1 // pred_check_branch
      %17 = sbr.rel (0) target = $region17
    $region16: #{tpu_custom_call.1} parent=1 // pred_region
      _
    $region17: #{tpu_custom_call.1} parent=1 // pred_fallthru
      _
    %v18 = vld [vmem:[%s0] sm:$0xff]
    %v19 = vld [vmem:[%s0 + $0x8] sm:$0xff]
    %v20 = vld [vmem:[%s0 + $0x10] sm:$0xff]
    %v21 = vld [vmem:[%s0 + $0x18] sm:$0xff]
    %v22 = vld [vmem:[%s0 + $0x20] sm:$0xff]
    %v23 = vld [vmem:[%s0 + $0x28] sm:$0xff]
    %v24 = vld [vmem:[%s0 + $0x30] sm:$0xff]
    %v25 = vld [vmem:[%s0 + $0x38] sm:$0xff]
    %v26 = vld [vmem:[%s2] sm:$0xff]
    %v27 = vld [vmem:[%s2 + $0x8] sm:$0xff]
    %v28 = vld [vmem:[%s2 + $0x10] sm:$0xff]
    %v29 = vld [vmem:[%s2 + $0x18] sm:$0xff]
    %v30 = vld [vmem:[%s2 + $0x20] sm:$0xff]
    %v31 = vld [vmem:[%s2 + $0x28] sm:$0xff]
    %v32 = vld [vmem:[%s2 + $0x30] sm:$0xff]
    %v33 = vld [vmem:[%s2 + $0x38] sm:$0xff]
    %v34 = vld [vmem:[%s2 + $0x40] sm:$0xff]
    %v35 = vld [vmem:[%s2 + $0x48] sm:$0xff]
    %v36 = vld [vmem:[%s2 + $0x50] sm:$0xff]
    %v37 = vld [vmem:[%s2 + $0x58] sm:$0xff]
    %v38 = vld [vmem:[%s2 + $0x60] sm:$0xff]
    %v39 = vld [vmem:[%s2 + $0x68] sm:$0xff]
    %v40 = vld [vmem:[%s2 + $0x70] sm:$0xff]
    %v41 = vld [vmem:[%s2 + $0x78] sm:$0xff]
    %v42 = vld [vmem:[%s1] sm:$0xff]
    %v43 = vld [vmem:[%s1 + $0x8] sm:$0xff]
    %v44 = vld [vmem:[%s1 + $0x10] sm:$0xff]
    %v45 = vld [vmem:[%s1 + $0x18] sm:$0xff]
    %v46 = vld [vmem:[%s1 + $0x20] sm:$0xff]
    %v47 = vld [vmem:[%s1 + $0x28] sm:$0xff]
    %v48 = vld [vmem:[%s1 + $0x30] sm:$0xff]
    %v49 = vld [vmem:[%s1 + $0x38] sm:$0xff]
    %vm50 = vcmask 523264
    %v52 = vsel %vm50, %v42, 0
    %v55 = vsel %vm50, %v43, 0
    %v58 = vsel %vm50, %v44, 0
    %v61 = vsel %vm50, %v45, 0
    %v64 = vsel %vm50, %v46, 0
    %v67 = vsel %vm50, %v47, 0
    %v70 = vsel %vm50, %v48, 0
    %v73 = vsel %vm50, %v49, 0
    %75 = vmatprep.subr.mxu0 0.0
    %76 = vmatpush1.msra.mxu0 0.0
    %77 = vmatprep.subr.mxu0 0.0
    %78 = vmatpush1.msra.mxu0 0.0
    %79 = vmatprep.subr.mxu0 0.0
    %80 = vmatpush1.msra.mxu0 0.0
    %81 = vmatprep.subr.mxu0 0.0
    %82 = vmatpush1.msra.mxu0 0.0
    %83 = vmatprep.subr.mxu0 0.0
    %84 = vmatpush1.msra.mxu0 0.0
    %85 = vmatprep.subr.mxu0 0.0
    %86 = vmatpush1.msra.mxu0 0.0
    %87 = vmatprep.subr.mxu0 0.0
    %88 = vmatpush1.msra.mxu0 0.0
    %89 = vmatprep.subr.mxu0 0.0
    %90 = vmatpush1.msra.mxu0 0.0
    %91 = vmatprep.subr.mxu0 0.0
    %92 = vmatpush1.msra.mxu0 %v25
    %93 = vmatprep.subr.mxu0 0.0
    %94 = vmatpush1.msra.mxu0 %v24
    %95 = vmatprep.subr.mxu0 0.0
    %96 = vmatpush1.msra.mxu0 %v23
    %97 = vmatprep.subr.mxu0 0.0
    %98 = vmatpush1.msra.mxu0 %v22
    %99 = vmatprep.subr.mxu0 0.0
    %100 = vmatpush1.msra.mxu0 %v21
    %101 = vmatprep.subr.mxu0 0.0
    %102 = vmatpush1.msra.mxu0 %v20
    %103 = vmatprep.subr.mxu0 0.0
    %104 = vmatpush1.msra.mxu0 %v19
    %105 = vmatprep.subr.mxu0 0.0
    %106 = vmatpush1.msra.mxu0 %v18
    %107 = vmatprep.subr.mxu0 0.0
    %108 = vmatpush2.msra.mxu0 0.0
    %109 = vmatprep.subr.mxu0 0.0
    %110 = vmatpush2.msra.mxu0 0.0
    %111 = vmatprep.subr.mxu0 0.0
    %112 = vmatpush2.msra.mxu0 0.0
    %113 = vmatprep.subr.mxu0 0.0
    %114 = vmatpush2.msra.mxu0 0.0
    %115 = vmatprep.subr.mxu0 0.0
    %116 = vmatpush2.msra.mxu0 0.0
    %117 = vmatprep.subr.mxu0 0.0
    %118 = vmatpush2.msra.mxu0 0.0
    %119 = vmatprep.subr.mxu0 0.0
    %120 = vmatpush2.msra.mxu0 0.0
    %121 = vmatprep.subr.mxu0 0.0
    %122 = vmatpush2.msra.mxu0 0.0
    %123 = vmatprep.subr.mxu0 0.0
    %124 = vmatpush2.msra.mxu0 0.0
    %125 = vmatprep.subr.mxu0 0.0
    %126 = vmatpush2.msra.mxu0 0.0
    %127 = vmatprep.subr.mxu0 0.0
    %128 = vmatpush2.msra.mxu0 0.0
    %129 = vmatprep.subr.mxu0 0.0
    %130 = vmatpush2.msra.mxu0 0.0
    %131 = vmatprep.subr.mxu0 0.0
    %132 = vmatpush2.msra.mxu0 0.0
    %133 = vmatprep.subr.mxu0 0.0
    %134 = vmatpush2.msra.mxu0 0.0
    %135 = vmatprep.subr.mxu0 0.0
    %136 = vmatpush2.msra.mxu0 0.0
    %137 = vmatprep.subr.mxu0 0.0
    %138 = vmatpush2.msra.mxu0 0.0
    %139 = vmatprep.mubr.f32.mxu0 0.0
    %140 = vmatmul.mubr.f32.gmra.mxu0 %v52
    %v141 = vpop.f32.mrf.mxu0
    %v142 = vadd.f32 0.0, %v141
    %v143 = vpop.f32.mrf.mxu0
    %144 = vmatprep.mubr.f32.mxu0 0.0
    %145 = vmatmul.mubr.f32.gmra.mxu0 %v55
    %v146 = vpop.f32.mrf.mxu0
    %v147 = vadd.f32 0.0, %v146
    %v148 = vpop.f32.mrf.mxu0
    %149 = vmatprep.mubr.f32.mxu0 0.0
    %150 = vmatmul.mubr.f32.gmra.mxu0 %v58
    %v151 = vpop.f32.mrf.mxu0
    %v152 = vadd.f32 0.0, %v151
    %v153 = vpop.f32.mrf.mxu0
    %154 = vmatprep.mubr.f32.mxu0 0.0
    %155 = vmatmul.mubr.f32.gmra.mxu0 %v61
    %v156 = vpop.f32.mrf.mxu0
    %v157 = vadd.f32 0.0, %v156
    %v158 = vpop.f32.mrf.mxu0
    %159 = vmatprep.mubr.f32.mxu0 0.0
    %160 = vmatmul.mubr.f32.gmra.mxu0 %v64
    %v161 = vpop.f32.mrf.mxu0
    %v162 = vadd.f32 0.0, %v161
    %v163 = vpop.f32.mrf.mxu0
    %164 = vmatprep.mubr.f32.mxu0 0.0
    %165 = vmatmul.mubr.f32.gmra.mxu0 %v67
    %v166 = vpop.f32.mrf.mxu0
    %v167 = vadd.f32 0.0, %v166
    %v168 = vpop.f32.mrf.mxu0
    %169 = vmatprep.mubr.f32.mxu0 0.0
    %170 = vmatmul.mubr.f32.gmra.mxu0 %v70
    %v171 = vpop.f32.mrf.mxu0
    %v172 = vadd.f32 0.0, %v171
    %v173 = vpop.f32.mrf.mxu0
    %174 = vmatprep.mubr.f32.mxu0 0.0
    %175 = vmatmul.mubr.f32.gmra.mxu0 %v73
    %v176 = vpop.f32.mrf.mxu0
    %v177 = vadd.f32 0.0, %v176
    %v178 = vpop.f32.mrf.mxu0
    %179 = vdwg.mxu0
    %s180 = scalar_lea.vmem %s2, 128
    %v181 = vld [vmem:[%s180] sm:$0xff]
    %v182 = vld [vmem:[%s180 + $0x8] sm:$0xff]
    %v183 = vld [vmem:[%s180 + $0x10] sm:$0xff]
    %v184 = vld [vmem:[%s180 + $0x18] sm:$0xff]
    %v185 = vld [vmem:[%s180 + $0x20] sm:$0xff]
    %v186 = vld [vmem:[%s180 + $0x28] sm:$0xff]
    %v187 = vld [vmem:[%s180 + $0x30] sm:$0xff]
    %v188 = vld [vmem:[%s180 + $0x38] sm:$0xff]
    %v189 = vld [vmem:[%s180 + $0x40] sm:$0xff]
    %v190 = vld [vmem:[%s180 + $0x48] sm:$0xff]
    %v191 = vld [vmem:[%s180 + $0x50] sm:$0xff]
    %v192 = vld [vmem:[%s180 + $0x58] sm:$0xff]
    %v193 = vld [vmem:[%s180 + $0x60] sm:$0xff]
    %v194 = vld [vmem:[%s180 + $0x68] sm:$0xff]
    %v195 = vld [vmem:[%s180 + $0x70] sm:$0xff]
    %v196 = vld [vmem:[%s180 + $0x78] sm:$0xff]
    %v198 = vsel %vm50, %v181, 0
    %v201 = vsel %vm50, %v182, 0
    %v204 = vsel %vm50, %v183, 0
    %v207 = vsel %vm50, %v184, 0
    %v210 = vsel %vm50, %v185, 0
    %v213 = vsel %vm50, %v186, 0
    %v216 = vsel %vm50, %v187, 0
    %v219 = vsel %vm50, %v188, 0
    %v222 = vsel %vm50, %v189, 0
    %v225 = vsel %vm50, %v190, 0
    %v228 = vsel %vm50, %v191, 0
    %v231 = vsel %vm50, %v192, 0
    %v234 = vsel %vm50, %v193, 0
    %v237 = vsel %vm50, %v194, 0
    %v240 = vsel %vm50, %v195, 0
    %v243 = vsel %vm50, %v196, 0
    %245 = vmatprep.subr.mxu0 0.0
    %246 = vmatpush1.msra.mxu0 0.0
    %247 = vmatprep.subr.mxu0 0.0
    %248 = vmatpush1.msra.mxu0 0.0
    %249 = vmatprep.subr.mxu0 0.0
    %250 = vmatpush1.msra.mxu0 0.0
    %251 = vmatprep.subr.mxu0 0.0
    %252 = vmatpush1.msra.mxu0 0.0
    %253 = vmatprep.subr.mxu0 0.0
    %254 = vmatpush1.msra.mxu0 0.0
    %255 = vmatprep.subr.mxu0 0.0
    %256 = vmatpush1.msra.mxu0 0.0
    %257 = vmatprep.subr.mxu0 0.0
    %258 = vmatpush1.msra.mxu0 0.0
    %259 = vmatprep.subr.mxu0 0.0
    %260 = vmatpush1.msra.mxu0 0.0
    %261 = vmatprep.subr.mxu0 0.0
    %262 = vmatpush1.msra.mxu0 %v177
    %263 = vmatprep.subr.mxu0 0.0
    %264 = vmatpush1.msra.mxu0 %v172
    %265 = vmatprep.subr.mxu0 0.0
    %266 = vmatpush1.msra.mxu0 %v167
    %267 = vmatprep.subr.mxu0 0.0
    %268 = vmatpush1.msra.mxu0 %v162
    %269 = vmatprep.subr.mxu0 0.0
    %270 = vmatpush1.msra.mxu0 %v157
    %271 = vmatprep.subr.mxu0 0.0
    %272 = vmatpush1.msra.mxu0 %v152
    %273 = vmatprep.subr.mxu0 0.0
    %274 = vmatpush1.msra.mxu0 %v147
    %275 = vmatprep.subr.mxu0 0.0
    %276 = vmatpush1.msra.mxu0 %v142
    %277 = vmatprep.subr.mxu0 0.0
    %278 = vmatpush2.msra.mxu0 0.0
    %279 = vmatprep.subr.mxu0 0.0
    %280 = vmatpush2.msra.mxu0 0.0
    %281 = vmatprep.subr.mxu0 0.0
    %282 = vmatpush2.msra.mxu0 0.0
    %283 = vmatprep.subr.mxu0 0.0
    %284 = vmatpush2.msra.mxu0 0.0
    %285 = vmatprep.subr.mxu0 0.0
    %286 = vmatpush2.msra.mxu0 0.0
    %287 = vmatprep.subr.mxu0 0.0
    %288 = vmatpush2.msra.mxu0 0.0
    %289 = vmatprep.subr.mxu0 0.0
    %290 = vmatpush2.msra.mxu0 0.0
    %291 = vmatprep.subr.mxu0 0.0
    %292 = vmatpush2.msra.mxu0 0.0
    %293 = vmatprep.subr.mxu0 0.0
    %294 = vmatpush2.msra.mxu0 0.0
    %295 = vmatprep.subr.mxu0 0.0
    %296 = vmatpush2.msra.mxu0 0.0
    %297 = vmatprep.subr.mxu0 0.0
    %298 = vmatpush2.msra.mxu0 0.0
    %299 = vmatprep.subr.mxu0 0.0
    %300 = vmatpush2.msra.mxu0 0.0
    %301 = vmatprep.subr.mxu0 0.0
    %302 = vmatpush2.msra.mxu0 0.0
    %303 = vmatprep.subr.mxu0 0.0
    %304 = vmatpush2.msra.mxu0 0.0
    %305 = vmatprep.subr.mxu0 0.0
    %306 = vmatpush2.msra.mxu0 0.0
    %307 = vmatprep.subr.mxu0 0.0
    %308 = vmatpush2.msra.mxu0 0.0
    %309 = vmatprep.mubr.f32.mxu0 0.0
    %310 = vmatmul.mubr.f32.gmra.mxu0 %v198
    %v311 = vpop.f32.mrf.mxu0
    %v312 = vadd.f32 0.0, %v311
    %v313 = vpop.f32.mrf.mxu0
    %314 = vmatprep.mubr.f32.mxu0 0.0
    %315 = vmatmul.mubr.f32.gmra.mxu0 %v201
    %v316 = vpop.f32.mrf.mxu0
    %v317 = vadd.f32 0.0, %v316
    %v318 = vpop.f32.mrf.mxu0
    %319 = vmatprep.mubr.f32.mxu0 0.0
    %320 = vmatmul.mubr.f32.gmra.mxu0 %v204
    %v321 = vpop.f32.mrf.mxu0
    %v322 = vadd.f32 0.0, %v321
    %v323 = vpop.f32.mrf.mxu0
    %324 = vmatprep.mubr.f32.mxu0 0.0
    %325 = vmatmul.mubr.f32.gmra.mxu0 %v207
    %v326 = vpop.f32.mrf.mxu0
    %v327 = vadd.f32 0.0, %v326
    %v328 = vpop.f32.mrf.mxu0
    %329 = vmatprep.mubr.f32.mxu0 0.0
    %330 = vmatmul.mubr.f32.gmra.mxu0 %v210
    %v331 = vpop.f32.mrf.mxu0
    %v332 = vadd.f32 0.0, %v331
    %v333 = vpop.f32.mrf.mxu0
    %334 = vmatprep.mubr.f32.mxu0 0.0
    %335 = vmatmul.mubr.f32.gmra.mxu0 %v213
    %v336 = vpop.f32.mrf.mxu0
    %v337 = vadd.f32 0.0, %v336
    %v338 = vpop.f32.mrf.mxu0
    %339 = vmatprep.mubr.f32.mxu0 0.0
    %340 = vmatmul.mubr.f32.gmra.mxu0 %v216
    %v341 = vpop.f32.mrf.mxu0
    %v342 = vadd.f32 0.0, %v341
    %v343 = vpop.f32.mrf.mxu0
    %344 = vmatprep.mubr.f32.mxu0 0.0
    %345 = vmatmul.mubr.f32.gmra.mxu0 %v219
    %v346 = vpop.f32.mrf.mxu0
    %v347 = vadd.f32 0.0, %v346
    %v348 = vpop.f32.mrf.mxu0
    %349 = vmatprep.mubr.f32.mxu0 0.0
    %350 = vmatmul.mubr.f32.gmra.mxu0 %v222
    %v351 = vpop.f32.mrf.mxu0
    %v352 = vadd.f32 0.0, %v351
    %v353 = vpop.f32.mrf.mxu0
    %354 = vmatprep.mubr.f32.mxu0 0.0
    %355 = vmatmul.mubr.f32.gmra.mxu0 %v225
    %v356 = vpop.f32.mrf.mxu0
    %v357 = vadd.f32 0.0, %v356
    %v358 = vpop.f32.mrf.mxu0
    %359 = vmatprep.mubr.f32.mxu0 0.0
    %360 = vmatmul.mubr.f32.gmra.mxu0 %v228
    %v361 = vpop.f32.mrf.mxu0
    %v362 = vadd.f32 0.0, %v361
    %v363 = vpop.f32.mrf.mxu0
    %364 = vmatprep.mubr.f32.mxu0 0.0
    %365 = vmatmul.mubr.f32.gmra.mxu0 %v231
    %v366 = vpop.f32.mrf.mxu0
    %v367 = vadd.f32 0.0, %v366
    %v368 = vpop.f32.mrf.mxu0
    %369 = vmatprep.mubr.f32.mxu0 0.0
    %370 = vmatmul.mubr.f32.gmra.mxu0 %v234
    %v371 = vpop.f32.mrf.mxu0
    %v372 = vadd.f32 0.0, %v371
    %v373 = vpop.f32.mrf.mxu0
    %374 = vmatprep.mubr.f32.mxu0 0.0
    %375 = vmatmul.mubr.f32.gmra.mxu0 %v237
    %v376 = vpop.f32.mrf.mxu0
    %v377 = vadd.f32 0.0, %v376
    %v378 = vpop.f32.mrf.mxu0
    %379 = vmatprep.mubr.f32.mxu0 0.0
    %380 = vmatmul.mubr.f32.gmra.mxu0 %v240
    %v381 = vpop.f32.mrf.mxu0
    %v382 = vadd.f32 0.0, %v381
    %v383 = vpop.f32.mrf.mxu0
    %384 = vmatprep.mubr.f32.mxu0 0.0
    %385 = vmatmul.mubr.f32.gmra.mxu0 %v243
    %v386 = vpop.f32.mrf.mxu0
    %v387 = vadd.f32 0.0, %v386
    %v388 = vpop.f32.mrf.mxu0
    %389 = vdwg.mxu0
    %v391 = vsel %vm50, %v26, 0
    %v394 = vsel %vm50, %v27, 0
    %v397 = vsel %vm50, %v28, 0
    %v400 = vsel %vm50, %v29, 0
    %v403 = vsel %vm50, %v30, 0
    %v406 = vsel %vm50, %v31, 0
    %v409 = vsel %vm50, %v32, 0
    %v412 = vsel %vm50, %v33, 0
    %v415 = vsel %vm50, %v34, 0
    %v418 = vsel %vm50, %v35, 0
    %v421 = vsel %vm50, %v36, 0
    %v424 = vsel %vm50, %v37, 0
    %v427 = vsel %vm50, %v38, 0
    %v430 = vsel %vm50, %v39, 0
    %v433 = vsel %vm50, %v40, 0
    %v436 = vsel %vm50, %v41, 0
    %438 = vmatprep.subr.mxu0 0.0
    %439 = vmatpush1.msra.mxu0 0.0
    %440 = vmatprep.subr.mxu0 0.0
    %441 = vmatpush1.msra.mxu0 0.0
    %442 = vmatprep.subr.mxu0 0.0
    %443 = vmatpush1.msra.mxu0 0.0
    %444 = vmatprep.subr.mxu0 0.0
    %445 = vmatpush1.msra.mxu0 0.0
    %446 = vmatprep.subr.mxu0 0.0
    %447 = vmatpush1.msra.mxu0 0.0
    %448 = vmatprep.subr.mxu0 0.0
    %449 = vmatpush1.msra.mxu0 0.0
    %450 = vmatprep.subr.mxu0 0.0
    %451 = vmatpush1.msra.mxu0 0.0
    %452 = vmatprep.subr.mxu0 0.0
    %453 = vmatpush1.msra.mxu0 0.0
    %454 = vmatprep.subr.mxu0 0.0
    %455 = vmatpush1.msra.mxu0 %v25
    %456 = vmatprep.subr.mxu0 0.0
    %457 = vmatpush1.msra.mxu0 %v24
    %458 = vmatprep.subr.mxu0 0.0
    %459 = vmatpush1.msra.mxu0 %v23
    %460 = vmatprep.subr.mxu0 0.0
    %461 = vmatpush1.msra.mxu0 %v22
    %462 = vmatprep.subr.mxu0 0.0
    %463 = vmatpush1.msra.mxu0 %v21
    %464 = vmatprep.subr.mxu0 0.0
    %465 = vmatpush1.msra.mxu0 %v20
    %466 = vmatprep.subr.mxu0 0.0
    %467 = vmatpush1.msra.mxu0 %v19
    %468 = vmatprep.subr.mxu0 0.0
    %469 = vmatpush1.msra.mxu0 %v18
    %470 = vmatprep.subr.mxu0 0.0
    %471 = vmatpush2.msra.mxu0 0.0
    %472 = vmatprep.subr.mxu0 0.0
    %473 = vmatpush2.msra.mxu0 0.0
    %474 = vmatprep.subr.mxu0 0.0
    %475 = vmatpush2.msra.mxu0 0.0
    %476 = vmatprep.subr.mxu0 0.0
    %477 = vmatpush2.msra.mxu0 0.0
    %478 = vmatprep.subr.mxu0 0.0
    %479 = vmatpush2.msra.mxu0 0.0
    %480 = vmatprep.subr.mxu0 0.0
    %481 = vmatpush2.msra.mxu0 0.0
    %482 = vmatprep.subr.mxu0 0.0
    %483 = vmatpush2.msra.mxu0 0.0
    %484 = vmatprep.subr.mxu0 0.0
    %485 = vmatpush2.msra.mxu0 0.0
    %486 = vmatprep.subr.mxu0 0.0
    %487 = vmatpush2.msra.mxu0 0.0
    %488 = vmatprep.subr.mxu0 0.0
    %489 = vmatpush2.msra.mxu0 0.0
    %490 = vmatprep.subr.mxu0 0.0
    %491 = vmatpush2.msra.mxu0 0.0
    %492 = vmatprep.subr.mxu0 0.0
    %493 = vmatpush2.msra.mxu0 0.0
    %494 = vmatprep.subr.mxu0 0.0
    %495 = vmatpush2.msra.mxu0 0.0
    %496 = vmatprep.subr.mxu0 0.0
    %497 = vmatpush2.msra.mxu0 0.0
    %498 = vmatprep.subr.mxu0 0.0
    %499 = vmatpush2.msra.mxu0 0.0
    %500 = vmatprep.subr.mxu0 0.0
    %501 = vmatpush2.msra.mxu0 0.0
    %502 = vmatprep.mubr.f32.mxu0 0.0
    %503 = vmatmul.mubr.f32.gmra.mxu0 %v391
    %v504 = vpop.f32.mrf.mxu0
    %v505 = vadd.f32 %v312, %v504
    %v506 = vpop.f32.mrf.mxu0
    %507 = vmatprep.mubr.f32.mxu0 0.0
    %508 = vmatmul.mubr.f32.gmra.mxu0 %v394
    %v509 = vpop.f32.mrf.mxu0
    %v510 = vadd.f32 %v317, %v509
    %v511 = vpop.f32.mrf.mxu0
    %512 = vmatprep.mubr.f32.mxu0 0.0
    %513 = vmatmul.mubr.f32.gmra.mxu0 %v397
    %v514 = vpop.f32.mrf.mxu0
    %v515 = vadd.f32 %v322, %v514
    %v516 = vpop.f32.mrf.mxu0
    %517 = vmatprep.mubr.f32.mxu0 0.0
    %518 = vmatmul.mubr.f32.gmra.mxu0 %v400
    %v519 = vpop.f32.mrf.mxu0
    %v520 = vadd.f32 %v327, %v519
    %v521 = vpop.f32.mrf.mxu0
    %522 = vmatprep.mubr.f32.mxu0 0.0
    %523 = vmatmul.mubr.f32.gmra.mxu0 %v403
    %v524 = vpop.f32.mrf.mxu0
    %v525 = vadd.f32 %v332, %v524
    %v526 = vpop.f32.mrf.mxu0
    %527 = vmatprep.mubr.f32.mxu0 0.0
    %528 = vmatmul.mubr.f32.gmra.mxu0 %v406
    %v529 = vpop.f32.mrf.mxu0
    %v530 = vadd.f32 %v337, %v529
    %v531 = vpop.f32.mrf.mxu0
    %532 = vmatprep.mubr.f32.mxu0 0.0
    %533 = vmatmul.mubr.f32.gmra.mxu0 %v409
    %v534 = vpop.f32.mrf.mxu0
    %v535 = vadd.f32 %v342, %v534
    %v536 = vpop.f32.mrf.mxu0
    %537 = vmatprep.mubr.f32.mxu0 0.0
    %538 = vmatmul.mubr.f32.gmra.mxu0 %v412
    %v539 = vpop.f32.mrf.mxu0
    %v540 = vadd.f32 %v347, %v539
    %v541 = vpop.f32.mrf.mxu0
    %542 = vmatprep.mubr.f32.mxu0 0.0
    %543 = vmatmul.mubr.f32.gmra.mxu0 %v415
    %v544 = vpop.f32.mrf.mxu0
    %v545 = vadd.f32 %v352, %v544
    %v546 = vpop.f32.mrf.mxu0
    %547 = vmatprep.mubr.f32.mxu0 0.0
    %548 = vmatmul.mubr.f32.gmra.mxu0 %v418
    %v549 = vpop.f32.mrf.mxu0
    %v550 = vadd.f32 %v357, %v549
    %v551 = vpop.f32.mrf.mxu0
    %552 = vmatprep.mubr.f32.mxu0 0.0
    %553 = vmatmul.mubr.f32.gmra.mxu0 %v421
    %v554 = vpop.f32.mrf.mxu0
    %v555 = vadd.f32 %v362, %v554
    %v556 = vpop.f32.mrf.mxu0
    %557 = vmatprep.mubr.f32.mxu0 0.0
    %558 = vmatmul.mubr.f32.gmra.mxu0 %v424
    %v559 = vpop.f32.mrf.mxu0
    %v560 = vadd.f32 %v367, %v559
    %v561 = vpop.f32.mrf.mxu0
    %562 = vmatprep.mubr.f32.mxu0 0.0
    %563 = vmatmul.mubr.f32.gmra.mxu0 %v427
    %v564 = vpop.f32.mrf.mxu0
    %v565 = vadd.f32 %v372, %v564
    %v566 = vpop.f32.mrf.mxu0
    %567 = vmatprep.mubr.f32.mxu0 0.0
    %568 = vmatmul.mubr.f32.gmra.mxu0 %v430
    %v569 = vpop.f32.mrf.mxu0
    %v570 = vadd.f32 %v377, %v569
    %v571 = vpop.f32.mrf.mxu0
    %572 = vmatprep.mubr.f32.mxu0 0.0
    %573 = vmatmul.mubr.f32.gmra.mxu0 %v433
    %v574 = vpop.f32.mrf.mxu0
    %v575 = vadd.f32 %v382, %v574
    %v576 = vpop.f32.mrf.mxu0
    %577 = vmatprep.mubr.f32.mxu0 0.0
    %578 = vmatmul.mubr.f32.gmra.mxu0 %v436
    %v579 = vpop.f32.mrf.mxu0
    %v580 = vadd.f32 %v387, %v579
    %v581 = vpop.f32.mrf.mxu0
    %582 = vdwg.mxu0
    %583 = vmatprep.subr.mxu0 0.0
    %584 = vmatpush1.msra.mxu0 0.0
    %585 = vmatprep.subr.mxu0 0.0
    %586 = vmatpush1.msra.mxu0 0.0
    %587 = vmatprep.subr.mxu0 0.0
    %588 = vmatpush1.msra.mxu0 0.0
    %589 = vmatprep.subr.mxu0 0.0
    %590 = vmatpush1.msra.mxu0 0.0
    %591 = vmatprep.subr.mxu0 0.0
    %592 = vmatpush1.msra.mxu0 0.0
    %593 = vmatprep.subr.mxu0 0.0
    %594 = vmatpush1.msra.mxu0 0.0
    %595 = vmatprep.subr.mxu0 0.0
    %596 = vmatpush1.msra.mxu0 0.0
    %597 = vmatprep.subr.mxu0 0.0
    %598 = vmatpush1.msra.mxu0 0.0
    %599 = vmatprep.subr.mxu0 0.0
    %600 = vmatpush1.msra.mxu0 %v177
    %601 = vmatprep.subr.mxu0 0.0
    %602 = vmatpush1.msra.mxu0 %v172
    %603 = vmatprep.subr.mxu0 0.0
    %604 = vmatpush1.msra.mxu0 %v167
    %605 = vmatprep.subr.mxu0 0.0
    %606 = vmatpush1.msra.mxu0 %v162
    %607 = vmatprep.subr.mxu0 0.0
    %608 = vmatpush1.msra.mxu0 %v157
    %609 = vmatprep.subr.mxu0 0.0
    %610 = vmatpush1.msra.mxu0 %v152
    %611 = vmatprep.subr.mxu0 0.0
    %612 = vmatpush1.msra.mxu0 %v147
    %613 = vmatprep.subr.mxu0 0.0
    %614 = vmatpush1.msra.mxu0 %v142
    %615 = vmatprep.subr.mxu0 0.0
    %616 = vmatpush2.msra.mxu0 0.0
    %617 = vmatprep.subr.mxu0 0.0
    %618 = vmatpush2.msra.mxu0 0.0
    %619 = vmatprep.subr.mxu0 0.0
    %620 = vmatpush2.msra.mxu0 0.0
    %621 = vmatprep.subr.mxu0 0.0
    %622 = vmatpush2.msra.mxu0 0.0
    %623 = vmatprep.subr.mxu0 0.0
    %624 = vmatpush2.msra.mxu0 0.0
    %625 = vmatprep.subr.mxu0 0.0
    %626 = vmatpush2.msra.mxu0 0.0
    %627 = vmatprep.subr.mxu0 0.0
    %628 = vmatpush2.msra.mxu0 0.0
    %629 = vmatprep.subr.mxu0 0.0
    %630 = vmatpush2.msra.mxu0 0.0
    %631 = vmatprep.subr.mxu0 0.0
    %632 = vmatpush2.msra.mxu0 0.0
    %633 = vmatprep.subr.mxu0 0.0
    %634 = vmatpush2.msra.mxu0 0.0
    %635 = vmatprep.subr.mxu0 0.0
    %636 = vmatpush2.msra.mxu0 0.0
    %637 = vmatprep.subr.mxu0 0.0
    %638 = vmatpush2.msra.mxu0 0.0
    %639 = vmatprep.subr.mxu0 0.0
    %640 = vmatpush2.msra.mxu0 0.0
    %641 = vmatprep.subr.mxu0 0.0
    %642 = vmatpush2.msra.mxu0 0.0
    %643 = vmatprep.subr.mxu0 0.0
    %644 = vmatpush2.msra.mxu0 0.0
    %645 = vmatprep.subr.mxu0 0.0
    %646 = vmatpush2.msra.mxu0 0.0
    %647 = vmatprep.mubr.f32.mxu0 0.0
    %648 = vmatmul.mubr.f32.gmra.mxu0 %v52
    %v649 = vpop.f32.mrf.mxu0
    %v650 = vadd.f32 0.0, %v649
    %v651 = vpop.f32.mrf.mxu0
    %652 = vmatprep.mubr.f32.mxu0 0.0
    %653 = vmatmul.mubr.f32.gmra.mxu0 %v55
    %v654 = vpop.f32.mrf.mxu0
    %v655 = vadd.f32 0.0, %v654
    %v656 = vpop.f32.mrf.mxu0
    %657 = vmatprep.mubr.f32.mxu0 0.0
    %658 = vmatmul.mubr.f32.gmra.mxu0 %v58
    %v659 = vpop.f32.mrf.mxu0
    %v660 = vadd.f32 0.0, %v659
    %v661 = vpop.f32.mrf.mxu0
    %662 = vmatprep.mubr.f32.mxu0 0.0
    %663 = vmatmul.mubr.f32.gmra.mxu0 %v61
    %v664 = vpop.f32.mrf.mxu0
    %v665 = vadd.f32 0.0, %v664
    %v666 = vpop.f32.mrf.mxu0
    %667 = vmatprep.mubr.f32.mxu0 0.0
    %668 = vmatmul.mubr.f32.gmra.mxu0 %v64
    %v669 = vpop.f32.mrf.mxu0
    %v670 = vadd.f32 0.0, %v669
    %v671 = vpop.f32.mrf.mxu0
    %672 = vmatprep.mubr.f32.mxu0 0.0
    %673 = vmatmul.mubr.f32.gmra.mxu0 %v67
    %v674 = vpop.f32.mrf.mxu0
    %v675 = vadd.f32 0.0, %v674
    %v676 = vpop.f32.mrf.mxu0
    %677 = vmatprep.mubr.f32.mxu0 0.0
    %678 = vmatmul.mubr.f32.gmra.mxu0 %v70
    %v679 = vpop.f32.mrf.mxu0
    %v680 = vadd.f32 0.0, %v679
    %v681 = vpop.f32.mrf.mxu0
    %682 = vmatprep.mubr.f32.mxu0 0.0
    %683 = vmatmul.mubr.f32.gmra.mxu0 %v73
    %v684 = vpop.f32.mrf.mxu0
    %v685 = vadd.f32 0.0, %v684
    %v686 = vpop.f32.mrf.mxu0
    %687 = vdwg.mxu0
    %v688 = vmul.f32 %v650, 2.0
    %v689 = vmul.f32 %v655, 2.0
    %v690 = vmul.f32 %v660, 2.0
    %v691 = vmul.f32 %v665, 2.0
    %v692 = vmul.f32 %v670, 2.0
    %v693 = vmul.f32 %v675, 2.0
    %v694 = vmul.f32 %v680, 2.0
    %v695 = vmul.f32 %v685, 2.0
    %v696 = vsub.f32 %v688, %v18
    %v697 = vsub.f32 %v689, %v19
    %v698 = vsub.f32 %v690, %v20
    %v699 = vsub.f32 %v691, %v21
    %v700 = vsub.f32 %v692, %v22
    %v701 = vsub.f32 %v693, %v23
    %v702 = vsub.f32 %v694, %v24
    %v703 = vsub.f32 %v695, %v25
    %s704 = scalar_lea.vmem %s2, 256
    %v705 = vld [vmem:[%s704] sm:$0xff]
    %v706 = vld [vmem:[%s704 + $0x8] sm:$0xff]
    %v707 = vld [vmem:[%s704 + $0x10] sm:$0xff]
    %v708 = vld [vmem:[%s704 + $0x18] sm:$0xff]
    %v709 = vld [vmem:[%s704 + $0x20] sm:$0xff]
    %v710 = vld [vmem:[%s704 + $0x28] sm:$0xff]
    %v711 = vld [vmem:[%s704 + $0x30] sm:$0xff]
    %v712 = vld [vmem:[%s704 + $0x38] sm:$0xff]
    %v713 = vld [vmem:[%s704 + $0x40] sm:$0xff]
    %v714 = vld [vmem:[%s704 + $0x48] sm:$0xff]
    %v715 = vld [vmem:[%s704 + $0x50] sm:$0xff]
    %v716 = vld [vmem:[%s704 + $0x58] sm:$0xff]
    %v717 = vld [vmem:[%s704 + $0x60] sm:$0xff]
    %v718 = vld [vmem:[%s704 + $0x68] sm:$0xff]
    %v719 = vld [vmem:[%s704 + $0x70] sm:$0xff]
    %v720 = vld [vmem:[%s704 + $0x78] sm:$0xff]
    %v722 = vsel %vm50, %v705, 0
    %v725 = vsel %vm50, %v706, 0
    %v728 = vsel %vm50, %v707, 0
    %v731 = vsel %vm50, %v708, 0
    %v734 = vsel %vm50, %v709, 0
    %v737 = vsel %vm50, %v710, 0
    %v740 = vsel %vm50, %v711, 0
    %v743 = vsel %vm50, %v712, 0
    %v746 = vsel %vm50, %v713, 0
    %v749 = vsel %vm50, %v714, 0
    %v752 = vsel %vm50, %v715, 0
    %v755 = vsel %vm50, %v716, 0
    %v758 = vsel %vm50, %v717, 0
    %v761 = vsel %vm50, %v718, 0
    %v764 = vsel %vm50, %v719, 0
    %v767 = vsel %vm50, %v720, 0
    %769 = vmatprep.subr.mxu0 0.0
    %770 = vmatpush1.msra.mxu0 0.0
    %771 = vmatprep.subr.mxu0 0.0
    %772 = vmatpush1.msra.mxu0 0.0
    %773 = vmatprep.subr.mxu0 0.0
    %774 = vmatpush1.msra.mxu0 0.0
    %775 = vmatprep.subr.mxu0 0.0
    %776 = vmatpush1.msra.mxu0 0.0
    %777 = vmatprep.subr.mxu0 0.0
    %778 = vmatpush1.msra.mxu0 0.0
    %779 = vmatprep.subr.mxu0 0.0
    %780 = vmatpush1.msra.mxu0 0.0
    %781 = vmatprep.subr.mxu0 0.0
    %782 = vmatpush1.msra.mxu0 0.0
    %783 = vmatprep.subr.mxu0 0.0
    %784 = vmatpush1.msra.mxu0 0.0
    %785 = vmatprep.subr.mxu0 0.0
    %786 = vmatpush1.msra.mxu0 %v703
    %787 = vmatprep.subr.mxu0 0.0
    %788 = vmatpush1.msra.mxu0 %v702
    %789 = vmatprep.subr.mxu0 0.0
    %790 = vmatpush1.msra.mxu0 %v701
    %791 = vmatprep.subr.mxu0 0.0
    %792 = vmatpush1.msra.mxu0 %v700
    %793 = vmatprep.subr.mxu0 0.0
    %794 = vmatpush1.msra.mxu0 %v699
    %795 = vmatprep.subr.mxu0 0.0
    %796 = vmatpush1.msra.mxu0 %v698
    %797 = vmatprep.subr.mxu0 0.0
    %798 = vmatpush1.msra.mxu0 %v697
    %799 = vmatprep.subr.mxu0 0.0
    %800 = vmatpush1.msra.mxu0 %v696
    %801 = vmatprep.subr.mxu0 0.0
    %802 = vmatpush2.msra.mxu0 0.0
    %803 = vmatprep.subr.mxu0 0.0
    %804 = vmatpush2.msra.mxu0 0.0
    %805 = vmatprep.subr.mxu0 0.0
    %806 = vmatpush2.msra.mxu0 0.0
    %807 = vmatprep.subr.mxu0 0.0
    %808 = vmatpush2.msra.mxu0 0.0
    %809 = vmatprep.subr.mxu0 0.0
    %810 = vmatpush2.msra.mxu0 0.0
    %811 = vmatprep.subr.mxu0 0.0
    %812 = vmatpush2.msra.mxu0 0.0
    %813 = vmatprep.subr.mxu0 0.0
    %814 = vmatpush2.msra.mxu0 0.0
    %815 = vmatprep.subr.mxu0 0.0
    %816 = vmatpush2.msra.mxu0 0.0
    %817 = vmatprep.subr.mxu0 0.0
    %818 = vmatpush2.msra.mxu0 0.0
    %819 = vmatprep.subr.mxu0 0.0
    %820 = vmatpush2.msra.mxu0 0.0
    %821 = vmatprep.subr.mxu0 0.0
    %822 = vmatpush2.msra.mxu0 0.0
    %823 = vmatprep.subr.mxu0 0.0
    %824 = vmatpush2.msra.mxu0 0.0
    %825 = vmatprep.subr.mxu0 0.0
    %826 = vmatpush2.msra.mxu0 0.0
    %827 = vmatprep.subr.mxu0 0.0
    %828 = vmatpush2.msra.mxu0 0.0
    %829 = vmatprep.subr.mxu0 0.0
    %830 = vmatpush2.msra.mxu0 0.0
    %831 = vmatprep.subr.mxu0 0.0
    %832 = vmatpush2.msra.mxu0 0.0
    %833 = vmatprep.mubr.f32.mxu0 0.0
    %834 = vmatmul.mubr.f32.gmra.mxu0 %v722
    %v835 = vpop.f32.mrf.mxu0
    %v836 = vadd.f32 0.0, %v835
    %v837 = vpop.f32.mrf.mxu0
    %838 = vmatprep.mubr.f32.mxu0 0.0
    %839 = vmatmul.mubr.f32.gmra.mxu0 %v725
    %v840 = vpop.f32.mrf.mxu0
    %v841 = vadd.f32 0.0, %v840
    %v842 = vpop.f32.mrf.mxu0
    %843 = vmatprep.mubr.f32.mxu0 0.0
    %844 = vmatmul.mubr.f32.gmra.mxu0 %v728
    %v845 = vpop.f32.mrf.mxu0
    %v846 = vadd.f32 0.0, %v845
    %v847 = vpop.f32.mrf.mxu0
    %848 = vmatprep.mubr.f32.mxu0 0.0
    %849 = vmatmul.mubr.f32.gmra.mxu0 %v731
    %v850 = vpop.f32.mrf.mxu0
    %v851 = vadd.f32 0.0, %v850
    %v852 = vpop.f32.mrf.mxu0
    %853 = vmatprep.mubr.f32.mxu0 0.0
    %854 = vmatmul.mubr.f32.gmra.mxu0 %v734
    %v855 = vpop.f32.mrf.mxu0
    %v856 = vadd.f32 0.0, %v855
    %v857 = vpop.f32.mrf.mxu0
    %858 = vmatprep.mubr.f32.mxu0 0.0
    %859 = vmatmul.mubr.f32.gmra.mxu0 %v737
    %v860 = vpop.f32.mrf.mxu0
    %v861 = vadd.f32 0.0, %v860
    %v862 = vpop.f32.mrf.mxu0
    %863 = vmatprep.mubr.f32.mxu0 0.0
    %864 = vmatmul.mubr.f32.gmra.mxu0 %v740
    %v865 = vpop.f32.mrf.mxu0
    %v866 = vadd.f32 0.0, %v865
    %v867 = vpop.f32.mrf.mxu0
    %868 = vmatprep.mubr.f32.mxu0 0.0
    %869 = vmatmul.mubr.f32.gmra.mxu0 %v743
    %v870 = vpop.f32.mrf.mxu0
    %v871 = vadd.f32 0.0, %v870
    %v872 = vpop.f32.mrf.mxu0
    %873 = vmatprep.mubr.f32.mxu0 0.0
    %874 = vmatmul.mubr.f32.gmra.mxu0 %v746
    %v875 = vpop.f32.mrf.mxu0
    %v876 = vadd.f32 0.0, %v875
    %v877 = vpop.f32.mrf.mxu0
    %878 = vmatprep.mubr.f32.mxu0 0.0
    %879 = vmatmul.mubr.f32.gmra.mxu0 %v749
    %v880 = vpop.f32.mrf.mxu0
    %v881 = vadd.f32 0.0, %v880
    %v882 = vpop.f32.mrf.mxu0
    %883 = vmatprep.mubr.f32.mxu0 0.0
    %884 = vmatmul.mubr.f32.gmra.mxu0 %v752
    %v885 = vpop.f32.mrf.mxu0
    %v886 = vadd.f32 0.0, %v885
    %v887 = vpop.f32.mrf.mxu0
    %888 = vmatprep.mubr.f32.mxu0 0.0
    %889 = vmatmul.mubr.f32.gmra.mxu0 %v755
    %v890 = vpop.f32.mrf.mxu0
    %v891 = vadd.f32 0.0, %v890
    %v892 = vpop.f32.mrf.mxu0
    %893 = vmatprep.mubr.f32.mxu0 0.0
    %894 = vmatmul.mubr.f32.gmra.mxu0 %v758
    %v895 = vpop.f32.mrf.mxu0
    %v896 = vadd.f32 0.0, %v895
    %v897 = vpop.f32.mrf.mxu0
    %898 = vmatprep.mubr.f32.mxu0 0.0
    %899 = vmatmul.mubr.f32.gmra.mxu0 %v761
    %v900 = vpop.f32.mrf.mxu0
    %v901 = vadd.f32 0.0, %v900
    %v902 = vpop.f32.mrf.mxu0
    %903 = vmatprep.mubr.f32.mxu0 0.0
    %904 = vmatmul.mubr.f32.gmra.mxu0 %v764
    %v905 = vpop.f32.mrf.mxu0
    %v906 = vadd.f32 0.0, %v905
    %v907 = vpop.f32.mrf.mxu0
    %908 = vmatprep.mubr.f32.mxu0 0.0
    %909 = vmatmul.mubr.f32.gmra.mxu0 %v767
    %v910 = vpop.f32.mrf.mxu0
    %v911 = vadd.f32 0.0, %v910
    %v912 = vpop.f32.mrf.mxu0
    %913 = vdwg.mxu0
    %v914 = vadd.f32 %v505, %v836
    %v915 = vadd.f32 %v510, %v841
    %v916 = vadd.f32 %v515, %v846
    %v917 = vadd.f32 %v520, %v851
    %v918 = vadd.f32 %v525, %v856
    %v919 = vadd.f32 %v530, %v861
    %v920 = vadd.f32 %v535, %v866
    %v921 = vadd.f32 %v540, %v871
    %v922 = vadd.f32 %v545, %v876
    %v923 = vadd.f32 %v550, %v881
    %v924 = vadd.f32 %v555, %v886
    %v925 = vadd.f32 %v560, %v891
    %v926 = vadd.f32 %v565, %v896
    %v927 = vadd.f32 %v570, %v901
    %v928 = vadd.f32 %v575, %v906
    %v929 = vadd.f32 %v580, %v911
    %v930 = vld [vmem:[%s3] sm:$0xff]
    %v931 = vld [vmem:[%s3 + $0x8] sm:$0xff]
    %v932 = vld [vmem:[%s3 + $0x10] sm:$0xff]
    %v933 = vld [vmem:[%s3 + $0x18] sm:$0xff]
    %v934 = vld [vmem:[%s3 + $0x20] sm:$0xff]
    %v935 = vld [vmem:[%s3 + $0x28] sm:$0xff]
    %v936 = vld [vmem:[%s3 + $0x30] sm:$0xff]
    %v937 = vld [vmem:[%s3 + $0x38] sm:$0xff]
    %v938 = vld [vmem:[%s3 + $0x40] sm:$0xff]
    %v939 = vld [vmem:[%s3 + $0x48] sm:$0xff]
    %v940 = vld [vmem:[%s3 + $0x50] sm:$0xff]
    %v941 = vld [vmem:[%s3 + $0x58] sm:$0xff]
    %v942 = vld [vmem:[%s3 + $0x60] sm:$0xff]
    %v943 = vld [vmem:[%s3 + $0x68] sm:$0xff]
    %v944 = vld [vmem:[%s3 + $0x70] sm:$0xff]
    %v945 = vld [vmem:[%s3 + $0x78] sm:$0xff]
    %947 = vset.pattern.permute.xlu0 0
    %948 = vperm.xlu0 %947, %v930
    %v949 = vpop.permute.xlu0 %948
    %952 = vset.pattern.permute.xlu0 0
    %953 = vperm.xlu0 %952, %v931
    %v954 = vpop.permute.xlu0 %953
    %957 = vset.pattern.permute.xlu0 0
    %958 = vperm.xlu0 %957, %v932
    %v959 = vpop.permute.xlu0 %958
    %962 = vset.pattern.permute.xlu0 0
    %963 = vperm.xlu0 %962, %v933
    %v964 = vpop.permute.xlu0 %963
    %967 = vset.pattern.permute.xlu0 0
    %968 = vperm.xlu0 %967, %v934
    %v969 = vpop.permute.xlu0 %968
    %972 = vset.pattern.permute.xlu0 0
    %973 = vperm.xlu0 %972, %v935
    %v974 = vpop.permute.xlu0 %973
    %977 = vset.pattern.permute.xlu0 0
    %978 = vperm.xlu0 %977, %v936
    %v979 = vpop.permute.xlu0 %978
    %982 = vset.pattern.permute.xlu0 0
    %983 = vperm.xlu0 %982, %v937
    %v984 = vpop.permute.xlu0 %983
    %987 = vset.pattern.permute.xlu0 0
    %988 = vperm.xlu0 %987, %v938
    %v989 = vpop.permute.xlu0 %988
    %992 = vset.pattern.permute.xlu0 0
    %993 = vperm.xlu0 %992, %v939
    %v994 = vpop.permute.xlu0 %993
    %997 = vset.pattern.permute.xlu0 0
    %998 = vperm.xlu0 %997, %v940
    %v999 = vpop.permute.xlu0 %998
    %1002 = vset.pattern.permute.xlu0 0
    %1003 = vperm.xlu0 %1002, %v941
    %v1004 = vpop.permute.xlu0 %1003
    %1007 = vset.pattern.permute.xlu0 0
    %1008 = vperm.xlu0 %1007, %v942
    %v1009 = vpop.permute.xlu0 %1008
    %1012 = vset.pattern.permute.xlu0 0
    %1013 = vperm.xlu0 %1012, %v943
    %v1014 = vpop.permute.xlu0 %1013
    %1017 = vset.pattern.permute.xlu0 0
    %1018 = vperm.xlu0 %1017, %v944
    %v1019 = vpop.permute.xlu0 %1018
    %1022 = vset.pattern.permute.xlu0 0
    %1023 = vperm.xlu0 %1022, %v945
    %v1024 = vpop.permute.xlu0 %1023
    %v1026 = vadd.f32 %v914, %v949
    %v1027 = vadd.f32 %v915, %v954
    %v1028 = vadd.f32 %v916, %v959
    %v1029 = vadd.f32 %v917, %v964
    %v1030 = vadd.f32 %v918, %v969
    %v1031 = vadd.f32 %v919, %v974
    %v1032 = vadd.f32 %v920, %v979
    %v1033 = vadd.f32 %v921, %v984
    %v1034 = vadd.f32 %v922, %v989
    %v1035 = vadd.f32 %v923, %v994
    %v1036 = vadd.f32 %v924, %v999
    %v1037 = vadd.f32 %v925, %v1004
    %v1038 = vadd.f32 %v926, %v1009
    %v1039 = vadd.f32 %v927, %v1014
    %v1040 = vadd.f32 %v928, %v1019
    %v1041 = vadd.f32 %v929, %v1024
    %1042 = vst [vmem:[#allocation2] sm:$0xff] %v1026
    %1043 = vst [vmem:[#allocation2 + $0x8] sm:$0xff] %v1027
    %1044 = vst [vmem:[#allocation2 + $0x10] sm:$0xff] %v1028
    %1045 = vst [vmem:[#allocation2 + $0x18] sm:$0xff] %v1029
    %1046 = vst [vmem:[#allocation2 + $0x20] sm:$0xff] %v1030
    %1047 = vst [vmem:[#allocation2 + $0x28] sm:$0xff] %v1031
    %1048 = vst [vmem:[#allocation2 + $0x30] sm:$0xff] %v1032
    %1049 = vst [vmem:[#allocation2 + $0x38] sm:$0xff] %v1033
    %1050 = vst [vmem:[#allocation2 + $0x40] sm:$0xff] %v1034
    %1051 = vst [vmem:[#allocation2 + $0x48] sm:$0xff] %v1035
    %1052 = vst [vmem:[#allocation2 + $0x50] sm:$0xff] %v1036
    %1053 = vst [vmem:[#allocation2 + $0x58] sm:$0xff] %v1037
    %1054 = vst [vmem:[#allocation2 + $0x60] sm:$0xff] %v1038
    %1055 = vst [vmem:[#allocation2 + $0x68] sm:$0xff] %v1039
    %1056 = vst [vmem:[#allocation2 + $0x70] sm:$0xff] %v1040
    %1057 = vst [vmem:[#allocation2 + $0x78] sm:$0xff] %v1041
    // Predicated region
    $region18: #{tpu_custom_call.1} parent=1 // pred_check
      _
    $region19: #{tpu_custom_call.1} parent=1 // pred_check_branch
      %1059 = sbr.rel (0) target = $region21
    $region20: #{tpu_custom_call.1} parent=1 // pred_region
      %s1061 = ssub.s32 2048, 2048
      %1062 = vsyncadd [#allocation3], %s1061
      %s1063 = sshll.u32 [#allocation2], 4
      %s1064 = int_to_ptr.vmem [resolvable:$true] %s1063
      %1069 = dma.vmem_to_hbm [thread:$0]  %s1064, 2048, %s4, [#allocation3], 128, 128, 8
    $region21: #{tpu_custom_call.1} parent=1 // pred_fallthru
      _
    // Predicated region
    $region22: #{tpu_custom_call.1} parent=1 // pred_check
      _
    $region23: #{tpu_custom_call.1} parent=1 // pred_check_branch
      %1071 = sbr.rel (0) target = $region25
    $region24: #{tpu_custom_call.1} parent=1 // pred_region
      %1072 = dma.done [#allocation3], 2048
    $region25: #{tpu_custom_call.1} parent=1 // pred_fallthru
      _
    %1073 = vsyncpa [#allocation3], 1

</llo_original>
